<compile_context>
chip_gen: v7x
topology: tpu7x:2x2x1
jax: 0.10.0
libtpu: 0.0.40
codegen_flags: <defaults>
</compile_context>

<pallas_src>
import functools

import jax
import jax.numpy as jnp
from jax import lax
from jax.experimental import pallas as pl
from jax.experimental.pallas import tpu as pltpu


def _round_up(a: int, b: int) -> int:
    return ((a + b - 1) // b) * b


def _msa_kernel(xq_ref, xkv_ref, wq_ref, wk_ref, wv_ref, wp_ref, b_ref,
                o_ref, k_cache, v_cache, acc_ref, *, num_heads, n_valid, n_pad):
    # xq_ref : (1, tq,    C) bf16  query rows for this (batch, q-tile)
    # xkv_ref: (1, N_pad, C) bf16  full (padded) sequence; block index depends only on b
    # wq_ref : (1, C, hd) bf16     per-head q weight, pre-scaled by head_dim**-0.5
    # wk_ref : (1, C, hd) bf16
    # wv_ref : (1, C, hd) bf16
    # wp_ref : (1, hd, C) bf16     per-head slice of the output projection
    # b_ref  : (1, C) f32          proj bias
    # o_ref  : (1, tq, C)          output tile (same block across the head axis)
    # k_cache/v_cache: (H, N_pad, hd) bf16 scratch, persists across grid steps
    # acc_ref: (tq, C) f32 accumulator scratch
    qi = pl.program_id(1)
    h = pl.program_id(2)

    # ---- Fill this head's K/V cache once per batch (first query tile only). --------
    @pl.when(qi == 0)
    def _fill_kv():
        xkv = xkv_ref[0]                                                      # (N_pad, C)
        k = jnp.dot(xkv, wk_ref[0], preferred_element_type=jnp.float32)      # (N_pad, hd)
        v = jnp.dot(xkv, wv_ref[0], preferred_element_type=jnp.float32)      # (N_pad, hd)
        k_cache[h] = k.astype(jnp.bfloat16)
        v_cache[h] = v.astype(jnp.bfloat16)

    @pl.when(h == 0)
    def _zero_acc():
        acc_ref[...] = jnp.zeros_like(acc_ref)

    # ---- Per-head attention for this query tile. ------------------------------------
    q = jnp.dot(xq_ref[0], wq_ref[0], preferred_element_type=jnp.float32)    # (tq, hd)
    # q @ k.T via contraction on both minor dims (no transpose of the cached K tile).
    s = lax.dot_general(q.astype(jnp.bfloat16), k_cache[h],
                        (((1,), (1,)), ((), ())),
                        preferred_element_type=jnp.float32)                   # (tq, N_pad)

    if n_pad != n_valid:  # static condition: only pay the mask when padding exists
        col = lax.broadcasted_iota(jnp.int32, s.shape, 1)
        s = jnp.where(col < n_valid, s, jnp.float32(-1e30))

    # Numerically-stable softmax with deferred normalization (f32 elementwise: v5e-safe;
    # on v6e/v7x p = exp((s - m).astype(bf16)) would use the bf16 EUP path).
    m = jnp.max(s, axis=-1, keepdims=True)
    p = jnp.exp(s - m)                                                         # (tq, N_pad)
    l = jnp.sum(p, axis=-1, keepdims=True)                                     # (tq, 1)

    ctx = jnp.dot(p.astype(jnp.bfloat16), v_cache[h],
                  preferred_element_type=jnp.float32)                          # (tq, hd)
    ctx = ctx * pl.reciprocal(l, approx=True)

    # Accumulate this head's projected contribution into the resident f32 accumulator.
    acc_ref[...] += jnp.dot(ctx.astype(jnp.bfloat16), wp_ref[0],
                            preferred_element_type=jnp.float32)                # (tq, C)

    @pl.when(h == num_heads - 1)
    def _emit():
        o_ref[0] = (acc_ref[...] + b_ref[...]).astype(o_ref.dtype)


def msa_pallas(x, wqkv_t, wproj_t, bproj, *, num_heads, q_tile=None):
    """x: (B, N, C); wqkv_t: (C, 3C) = Wqkv.T; wproj_t: (C, C) = Wproj.T; bproj: (C,)."""
    B, N, C = x.shape
    H = num_heads
    hd = C // H
    scale = hd ** (-0.5)

    # ---- host-side layout plumbing (done once, outside the kernel) -----------------
    # Column j of wqkv_t corresponds to (three, head, d), matching reshape(B,N,3,H,hd).
    w3 = wqkv_t.astype(jnp.float32).reshape(C, 3, H, hd)
    wq_heads = (jnp.transpose(w3[:, 0], (1, 0, 2)) * scale).astype(jnp.bfloat16)  # (H, C, hd)
    wk_heads = jnp.transpose(w3[:, 1], (1, 0, 2)).astype(jnp.bfloat16)            # (H, C, hd)
    wv_heads = jnp.transpose(w3[:, 2], (1, 0, 2)).astype(jnp.bfloat16)            # (H, C, hd)
    wp_heads = wproj_t.astype(jnp.float32).reshape(H, hd, C).astype(jnp.bfloat16)  # (H, hd, C)
    bproj2 = bproj.astype(jnp.float32).reshape(1, C)

    # ---- query-tile size + padding: keep the live (tq, N_pad) score bounded --------
    if q_tile is None:
        q_tile = 256 if N > 256 else _round_up(N, 8)   # 256 cap: safe on v7x's 64 MiB VMEM
    q_tile = min(_round_up(q_tile, 8), _round_up(N, 8))
    n_pad = _round_up(N, q_tile)
    n_q = n_pad // q_tile

    x_in = x if n_pad == N else jnp.pad(x, ((0, 0), (0, n_pad - N), (0, 0)))
    x_in = x_in.astype(jnp.bfloat16)       # bf16 HBM->VMEM streams (half the DMA bytes)

    kernel = functools.partial(_msa_kernel, num_heads=H, n_valid=N, n_pad=n_pad)

    # Advisory cost estimate (K/V projections counted once per batch, bf16 byte counts).
    flops = 8 * B * n_pad * C * C + 4 * B * n_pad * n_pad * C
    transcendentals = B * H * n_pad * n_pad
    bytes_accessed = (2 * B * n_pad * C        # xq stream (bf16)
                      + 2 * B * n_pad * C      # xkv stream (bf16, once per batch)
                      + 2 * 4 * C * C + 4 * C  # bf16 weights + f32 bias
                      + x.dtype.itemsize * B * n_pad * C)  # output
    cost = pl.CostEstimate(flops=flops, transcendentals=transcendentals,
                           bytes_accessed=bytes_accessed)

    # Rough VMEM budget; only raise the scoped limit when actually needed.
    hd_lanes = _round_up(hd, 128)
    vmem_est = (2 * q_tile * C * 2                 # xq double buffer (bf16)
                + 2 * n_pad * C * 2                # xkv double buffer (bf16)
                + 2 * 4 * C * max(hd_lanes, C) * 2 # per-head weights, double buffered
                + 2 * H * n_pad * hd_lanes * 2     # K + V caches (lane-padded bf16)
                + q_tile * C * 4                   # f32 accumulator
                + 3 * q_tile * _round_up(n_pad, 128) * 4  # s, p and headroom
                + 2 * q_tile * C * x.dtype.itemsize)      # output double buffer
    cp_kwargs = dict(dimension_semantics=("parallel", "arbitrary", "arbitrary"))
    if vmem_est > 30 * 1024 * 1024:
        cp_kwargs["vmem_limit_bytes"] = int(min(vmem_est * 3 // 2, 96 * 1024 * 1024))

    out = pl.pallas_call(
        kernel,
        out_shape=jax.ShapeDtypeStruct((B, n_pad, C), x.dtype),
        grid_spec=pltpu.PrefetchScalarGridSpec(
            num_scalar_prefetch=0,
            grid=(B, n_q, H),
            in_specs=[
                pl.BlockSpec((1, q_tile, C), lambda b, qi, h: (b, qi, 0)),  # x (query tile)
                pl.BlockSpec((1, n_pad, C), lambda b, qi, h: (b, 0, 0)),    # x (full, K/V fill)
                pl.BlockSpec((1, C, hd), lambda b, qi, h: (h, 0, 0)),       # wq head h (scaled)
                pl.BlockSpec((1, C, hd), lambda b, qi, h: (h, 0, 0)),       # wk head h
                pl.BlockSpec((1, C, hd), lambda b, qi, h: (h, 0, 0)),       # wv head h
                pl.BlockSpec((1, hd, C), lambda b, qi, h: (h, 0, 0)),       # wproj head h
                pl.BlockSpec((1, C), lambda b, qi, h: (0, 0)),              # proj bias
            ],
            out_specs=pl.BlockSpec((1, q_tile, C), lambda b, qi, h: (b, qi, 0)),
            scratch_shapes=[
                pltpu.VMEM((H, n_pad, hd), jnp.bfloat16),   # K cache (per batch)
                pltpu.VMEM((H, n_pad, hd), jnp.bfloat16),   # V cache (per batch)
                pltpu.VMEM((q_tile, C), jnp.float32),       # output accumulator
            ],
        ),
        compiler_params=pltpu.CompilerParams(**cp_kwargs),
        cost_estimate=cost,
    )(x_in, x_in, wq_heads, wk_heads, wv_heads, wp_heads, bproj2)

    return out[:, :N, :] if n_pad != N else out


def msa_reference(x, wqkv_t, wproj_t, bproj, *, num_heads):
    # Pure-JAX f32 reference mirroring the PyTorch forward exactly.
    B, N, C = x.shape
    hd = C // num_heads
    scale = hd ** (-0.5)
    qkv = jnp.einsum('bnc,cd->bnd', x, wqkv_t)                       # (B, N, 3C)
    qkv = qkv.reshape(B, N, 3, num_heads, hd).transpose(2, 0, 3, 1, 4)
    q, k, v = qkv[0], qkv[1], qkv[2]                                 # (B, H, N, hd)
    attn = jnp.einsum('bhnd,bhmd->bhnm', q, k) * scale
    attn = jax.nn.softmax(attn, axis=-1)
    out = jnp.einsum('bhnm,bhmd->bhnd', attn, v)                     # (B, H, N, hd)
    out = out.transpose(0, 2, 1, 3).reshape(B, N, C)
    return jnp.einsum('bnc,cd->bnd', out, wproj_t) + bproj[None, None, :]


if __name__ == "__main__":
    B, N, C = 2, 8, 32
    num_heads = 8

    key = jax.random.PRNGKey(0)
    kx, kw1, kw2, kb = jax.random.split(key, 4)

    x = jax.random.normal(kx, (B, N, C), dtype=jnp.float32)
    # PyTorch parameter shapes: qkv.weight (3C, C), proj.weight (C, C), proj.bias (C,)
    wqkv = jax.random.normal(kw1, (3 * C, C), dtype=jnp.float32) * 0.05
    wproj = jax.random.normal(kw2, (C, C), dtype=jnp.float32) * 0.05
    bproj = jax.random.normal(kb, (C,), dtype=jnp.float32) * 0.05

    # Pass transposed weights (in, out) so the math is x @ W.T as in PyTorch.
    wqkv_t = wqkv.T                      # (C, 3C)
    wproj_t = wproj.T                    # (C, C)

    y = msa_pallas(x, wqkv_t, wproj_t, bproj, num_heads=num_heads)
    y = jax.block_until_ready(y)

    y_ref = msa_reference(x, wqkv_t, wproj_t, bproj, num_heads=num_heads)
    # bf16 inputs/matmul operands (f32 accumulation) + approx reciprocal -> looser tol.
    assert jnp.allclose(y, y_ref, atol=2e-2, rtol=2e-2), "Pallas MSA mismatch vs reference"

    print("KERNEL_OK")
</pallas_src>

<mosaic_0001>
module attributes {stable_mosaic.version = 11 : i64} {
  func.func @_msa_kernel(%arg0: i32, %arg1: i32, %arg2: i32, %arg3: memref<1x8x32xbf16, #tpu.memory_space<vmem>>, %arg4: memref<1x8x32xbf16, #tpu.memory_space<vmem>>, %arg5: memref<1x32x4xbf16, #tpu.memory_space<vmem>>, %arg6: memref<1x32x4xbf16, #tpu.memory_space<vmem>>, %arg7: memref<1x32x4xbf16, #tpu.memory_space<vmem>>, %arg8: memref<1x4x32xbf16, #tpu.memory_space<vmem>>, %arg9: memref<1x32xf32, #tpu.memory_space<vmem>>, %arg10: memref<1x8x32xf32, #tpu.memory_space<vmem>>, %arg11: memref<8x8x4xbf16, #tpu.memory_space<vmem>>, %arg12: memref<8x8x4xbf16, #tpu.memory_space<vmem>>, %arg13: memref<8x32xf32, #tpu.memory_space<vmem>>) attributes {dimension_semantics = [#tpu.dimension_semantics<parallel>, #tpu.dimension_semantics<arbitrary>, #tpu.dimension_semantics<arbitrary>], iteration_bounds = array<i64: 2, 1, 8>, scalar_prefetch = 0 : i64, scratch_operands = 3 : i64, tpu.core_type = #tpu.core_type<tc>, window_params = [{transform_indices = @transform_0, window_bounds = array<i64: 1, 8, 32>}, {transform_indices = @transform_1, window_bounds = array<i64: 1, 8, 32>}, {transform_indices = @transform_2, window_bounds = array<i64: 1, 32, 4>}, {transform_indices = @transform_3, window_bounds = array<i64: 1, 32, 4>}, {transform_indices = @transform_4, window_bounds = array<i64: 1, 32, 4>}, {transform_indices = @transform_5, window_bounds = array<i64: 1, 4, 32>}, {pipeline_mode = #tpu.pipeline_mode<synchronous>, transform_indices = @transform_6, window_bounds = array<i64: 1, 32>}, {transform_indices = @transform_7, window_bounds = array<i64: 1, 8, 32>}]} {
    %c0_i32 = arith.constant 0 : i32
    %0 = arith.cmpi eq, %arg1, %c0_i32 : i32
    %1 = arith.extui %0 : i1 to i32
    %c0_i32_0 = arith.constant 0 : i32
    %2 = arith.cmpi ne, %1, %c0_i32_0 : i32
    scf.if %2 {
      %c0_25 = arith.constant 0 : index
      %c0_26 = arith.constant 0 : index
      %c0_27 = arith.constant 0 : index
      %41 = vector.load %arg4[%c0_25, %c0_26, %c0_27] : memref<1x8x32xbf16, #tpu.memory_space<vmem>>, vector<1x8x32xbf16>
      %42 = vector.shape_cast %41 : vector<1x8x32xbf16> to vector<8x32xbf16>
      %c0_28 = arith.constant 0 : index
      %c0_29 = arith.constant 0 : index
      %c0_30 = arith.constant 0 : index
      %43 = vector.load %arg6[%c0_28, %c0_29, %c0_30] : memref<1x32x4xbf16, #tpu.memory_space<vmem>>, vector<1x32x4xbf16>
      %44 = vector.shape_cast %43 : vector<1x32x4xbf16> to vector<32x4xbf16>
      %cst_31 = arith.constant dense<0.000000e+00> : vector<8x4xf32>
      %45 = tpu.matmul %42, %44, %cst_31 {dimension_numbers = #tpu.dot_dimension_numbers<[1], [0], [0], [1], [0, 0, 1, 1], [], []>} : vector<8x32xbf16>, vector<32x4xbf16>, vector<8x4xf32> -> vector<8x4xf32>
      %c0_32 = arith.constant 0 : index
      %c0_33 = arith.constant 0 : index
      %c0_34 = arith.constant 0 : index
      %46 = vector.load %arg7[%c0_32, %c0_33, %c0_34] : memref<1x32x4xbf16, #tpu.memory_space<vmem>>, vector<1x32x4xbf16>
      %47 = vector.shape_cast %46 : vector<1x32x4xbf16> to vector<32x4xbf16>
      %cst_35 = arith.constant dense<0.000000e+00> : vector<8x4xf32>
      %48 = tpu.matmul %42, %47, %cst_35 {dimension_numbers = #tpu.dot_dimension_numbers<[1], [0], [0], [1], [0, 0, 1, 1], [], []>} : vector<8x32xbf16>, vector<32x4xbf16>, vector<8x4xf32> -> vector<8x4xf32>
      %49 = arith.truncf %45 : vector<8x4xf32> to vector<8x4xbf16>
      %50 = arith.index_cast %arg2 : i32 to index
      %c0_36 = arith.constant 0 : index
      %c0_37 = arith.constant 0 : index
      %51 = vector.load %arg11[%50, %c0_36, %c0_37] : memref<8x8x4xbf16, #tpu.memory_space<vmem>>, vector<1x8x4xbf16>
      %52 = vector.shape_cast %51 : vector<1x8x4xbf16> to vector<8x4xbf16>
      %53 = vector.shape_cast %49 : vector<8x4xbf16> to vector<1x8x4xbf16>
      tpu.vector_store %arg11[%50, %c0_36, %c0_37], %53 {strides = array<i32>} : memref<8x8x4xbf16, #tpu.memory_space<vmem>>, vector<1x8x4xbf16>,
      %54 = arith.truncf %48 : vector<8x4xf32> to vector<8x4xbf16>
      %55 = arith.index_cast %arg2 : i32 to index
      %c0_38 = arith.constant 0 : index
      %c0_39 = arith.constant 0 : index
      %56 = vector.load %arg12[%55, %c0_38, %c0_39] : memref<8x8x4xbf16, #tpu.memory_space<vmem>>, vector<1x8x4xbf16>
      %57 = vector.shape_cast %56 : vector<1x8x4xbf16> to vector<8x4xbf16>
      %58 = vector.shape_cast %54 : vector<8x4xbf16> to vector<1x8x4xbf16>
      tpu.vector_store %arg12[%55, %c0_38, %c0_39], %58 {strides = array<i32>} : memref<8x8x4xbf16, #tpu.memory_space<vmem>>, vector<1x8x4xbf16>,
    } else {
    }
    %c0_i32_1 = arith.constant 0 : i32
    %3 = arith.cmpi eq, %arg2, %c0_i32_1 : i32
    %4 = arith.extui %3 : i1 to i32
    %c0_i32_2 = arith.constant 0 : i32
    %5 = arith.cmpi ne, %4, %c0_i32_2 : i32
    scf.if %5 {
      %cst_25 = arith.constant 0.000000e+00 : f32
      %41 = vector.broadcast %cst_25 : f32 to vector<8x32xf32>
      %c0_26 = arith.constant 0 : index
      %c0_27 = arith.constant 0 : index
      %42 = vector.load %arg13[%c0_26, %c0_27] : memref<8x32xf32, #tpu.memory_space<vmem>>, vector<8x32xf32>
      tpu.vector_store %arg13[%c0_26, %c0_27], %41 {strides = array<i32>} : memref<8x32xf32, #tpu.memory_space<vmem>>, vector<8x32xf32>,
    } else {
    }
    %c0 = arith.constant 0 : index
    %c0_3 = arith.constant 0 : index
    %c0_4 = arith.constant 0 : index
    %6 = vector.load %arg3[%c0, %c0_3, %c0_4] : memref<1x8x32xbf16, #tpu.memory_space<vmem>>, vector<1x8x32xbf16>
    %7 = vector.shape_cast %6 : vector<1x8x32xbf16> to vector<8x32xbf16>
    %c0_5 = arith.constant 0 : index
    %c0_6 = arith.constant 0 : index
    %c0_7 = arith.constant 0 : index
    %8 = vector.load %arg5[%c0_5, %c0_6, %c0_7] : memref<1x32x4xbf16, #tpu.memory_space<vmem>>, vector<1x32x4xbf16>
    %9 = vector.shape_cast %8 : vector<1x32x4xbf16> to vector<32x4xbf16>
    %cst = arith.constant dense<0.000000e+00> : vector<8x4xf32>
    %10 = tpu.matmul %7, %9, %cst {dimension_numbers = #tpu.dot_dimension_numbers<[1], [0], [0], [1], [0, 0, 1, 1], [], []>} : vector<8x32xbf16>, vector<32x4xbf16>, vector<8x4xf32> -> vector<8x4xf32>
    %11 = arith.truncf %10 : vector<8x4xf32> to vector<8x4xbf16>
    %12 = arith.index_cast %arg2 : i32 to index
    %c0_8 = arith.constant 0 : index
    %c0_9 = arith.constant 0 : index
    %13 = vector.load %arg11[%12, %c0_8, %c0_9] : memref<8x8x4xbf16, #tpu.memory_space<vmem>>, vector<1x8x4xbf16>
    %14 = vector.shape_cast %13 : vector<1x8x4xbf16> to vector<8x4xbf16>
    %cst_10 = arith.constant dense<0.000000e+00> : vector<8x8xf32>
    %15 = tpu.matmul %11, %14, %cst_10 {dimension_numbers = #tpu.dot_dimension_numbers<[1], [1], [0], [0], [0, 0, 1, 0], [], []>} : vector<8x4xbf16>, vector<8x4xbf16>, vector<8x8xf32> -> vector<8x8xf32>
    %cst_11 = arith.constant dense<0xFF800000> : vector<8xf32>
    %16 = vector.multi_reduction <maximumf>, %15, %cst_11 [1] : vector<8x8xf32> to vector<8xf32>
    %17 = vector.shape_cast %16 : vector<8xf32> to vector<8x1xf32>
    %18 = vector.broadcast %17 : vector<8x1xf32> to vector<8x8xf32>
    %19 = arith.subf %15, %18 : vector<8x8xf32>
    %20 = math.exp %19 : vector<8x8xf32>
    %cst_12 = arith.constant dense<0.000000e+00> : vector<8xf32>
    %21 = vector.multi_reduction <add>, %20, %cst_12 [1] : vector<8x8xf32> to vector<8xf32>
    %22 = vector.shape_cast %21 : vector<8xf32> to vector<8x1xf32>
    %23 = arith.truncf %20 : vector<8x8xf32> to vector<8x8xbf16>
    %24 = arith.index_cast %arg2 : i32 to index
    %c0_13 = arith.constant 0 : index
    %c0_14 = arith.constant 0 : index
    %25 = vector.load %arg12[%24, %c0_13, %c0_14] : memref<8x8x4xbf16, #tpu.memory_space<vmem>>, vector<1x8x4xbf16>
    %26 = vector.shape_cast %25 : vector<1x8x4xbf16> to vector<8x4xbf16>
    %cst_15 = arith.constant dense<0.000000e+00> : vector<8x4xf32>
    %27 = tpu.matmul %23, %26, %cst_15 {dimension_numbers = #tpu.dot_dimension_numbers<[1], [0], [0], [1], [0, 0, 1, 1], [], []>} : vector<8x8xbf16>, vector<8x4xbf16>, vector<8x4xf32> -> vector<8x4xf32>
    %28 = tpu.reciprocal %22 {approx = true} : vector<8x1xf32> -> vector<8x1xf32>
    %29 = vector.broadcast %28 : vector<8x1xf32> to vector<8x4xf32>
    %30 = arith.mulf %27, %29 : vector<8x4xf32>
    %c0_16 = arith.constant 0 : index
    %c0_17 = arith.constant 0 : index
    %31 = vector.load %arg13[%c0_16, %c0_17] : memref<8x32xf32, #tpu.memory_space<vmem>>, vector<8x32xf32>
    %32 = arith.truncf %30 : vector<8x4xf32> to vector<8x4xbf16>
    %c0_18 = arith.constant 0 : index
    %c0_19 = arith.constant 0 : index
    %c0_20 = arith.constant 0 : index
    %33 = vector.load %arg8[%c0_18, %c0_19, %c0_20] : memref<1x4x32xbf16, #tpu.memory_space<vmem>>, vector<1x4x32xbf16>
    %34 = vector.shape_cast %33 : vector<1x4x32xbf16> to vector<4x32xbf16>
    %cst_21 = arith.constant dense<0.000000e+00> : vector<8x32xf32>
    %35 = tpu.matmul %32, %34, %cst_21 {dimension_numbers = #tpu.dot_dimension_numbers<[1], [0], [0], [1], [0, 0, 1, 1], [], []>} : vector<8x4xbf16>, vector<4x32xbf16>, vector<8x32xf32> -> vector<8x32xf32>
    %36 = arith.addf %31, %35 : vector<8x32xf32>
    %c0_22 = arith.constant 0 : index
    %c0_23 = arith.constant 0 : index
    %37 = vector.load %arg13[%c0_22, %c0_23] : memref<8x32xf32, #tpu.memory_space<vmem>>, vector<8x32xf32>
    tpu.vector_store %arg13[%c0_22, %c0_23], %36 {strides = array<i32>} : memref<8x32xf32, #tpu.memory_space<vmem>>, vector<8x32xf32>,
    %c7_i32 = arith.constant 7 : i32
    %38 = arith.cmpi eq, %arg2, %c7_i32 : i32
    %39 = arith.extui %38 : i1 to i32
    %c0_i32_24 = arith.constant 0 : i32
    %40 = arith.cmpi ne, %39, %c0_i32_24 : i32
    scf.if %40 {
      %c0_25 = arith.constant 0 : index
      %c0_26 = arith.constant 0 : index
      %41 = vector.load %arg13[%c0_25, %c0_26] : memref<8x32xf32, #tpu.memory_space<vmem>>, vector<8x32xf32>
      %c0_27 = arith.constant 0 : index
      %c0_28 = arith.constant 0 : index
      %42 = vector.load %arg9[%c0_27, %c0_28] : memref<1x32xf32, #tpu.memory_space<vmem>>, vector<1x32xf32>
      %43 = vector.broadcast %42 : vector<1x32xf32> to vector<8x32xf32>
      %44 = arith.addf %41, %43 : vector<8x32xf32>
      %c0_29 = arith.constant 0 : index
      %c0_30 = arith.constant 0 : index
      %c0_31 = arith.constant 0 : index
      %45 = vector.load %arg10[%c0_29, %c0_30, %c0_31] : memref<1x8x32xf32, #tpu.memory_space<vmem>>, vector<1x8x32xf32>
      %46 = vector.shape_cast %45 : vector<1x8x32xf32> to vector<8x32xf32>
      %47 = vector.shape_cast %44 : vector<8x32xf32> to vector<1x8x32xf32>
      tpu.vector_store %arg10[%c0_29, %c0_30, %c0_31], %47 {strides = array<i32>} : memref<1x8x32xf32, #tpu.memory_space<vmem>>, vector<1x8x32xf32>,
    } else {
    }
    return
  }
  func.func @transform_0(%arg0: i32, %arg1: i32, %arg2: i32) -> (i32, i32, i32) {
    %c0_i32 = arith.constant 0 : i32
    %c0_i32_0 = arith.constant 0 : i32
    return %arg0, %arg1, %c0_i32 : i32, i32, i32
  }
  func.func @transform_1(%arg0: i32, %arg1: i32, %arg2: i32) -> (i32, i32, i32) {
    %c0_i32 = arith.constant 0 : i32
    %c0_i32_0 = arith.constant 0 : i32
    %c0_i32_1 = arith.constant 0 : i32
    return %arg0, %c0_i32, %c0_i32_0 : i32, i32, i32
  }
  func.func @transform_2(%arg0: i32, %arg1: i32, %arg2: i32) -> (i32, i32, i32) {
    %c0_i32 = arith.constant 0 : i32
    %c0_i32_0 = arith.constant 0 : i32
    %c0_i32_1 = arith.constant 0 : i32
    return %arg2, %c0_i32, %c0_i32_0 : i32, i32, i32
  }
  func.func @transform_3(%arg0: i32, %arg1: i32, %arg2: i32) -> (i32, i32, i32) {
    %c0_i32 = arith.constant 0 : i32
    %c0_i32_0 = arith.constant 0 : i32
    %c0_i32_1 = arith.constant 0 : i32
    return %arg2, %c0_i32, %c0_i32_0 : i32, i32, i32
  }
  func.func @transform_4(%arg0: i32, %arg1: i32, %arg2: i32) -> (i32, i32, i32) {
    %c0_i32 = arith.constant 0 : i32
    %c0_i32_0 = arith.constant 0 : i32
    %c0_i32_1 = arith.constant 0 : i32
    return %arg2, %c0_i32, %c0_i32_0 : i32, i32, i32
  }
  func.func @transform_5(%arg0: i32, %arg1: i32, %arg2: i32) -> (i32, i32, i32) {
    %c0_i32 = arith.constant 0 : i32
    %c0_i32_0 = arith.constant 0 : i32
    %c0_i32_1 = arith.constant 0 : i32
    return %arg2, %c0_i32, %c0_i32_0 : i32, i32, i32
  }
  func.func @transform_6(%arg0: i32, %arg1: i32, %arg2: i32) -> (i32, i32) {
    %c0_i32 = arith.constant 0 : i32
    %c0_i32_0 = arith.constant 0 : i32
    %c0_i32_1 = arith.constant 0 : i32
    return %c0_i32, %c0_i32_0 : i32, i32
  }
  func.func @transform_7(%arg0: i32, %arg1: i32, %arg2: i32) -> (i32, i32, i32) {
    %c0_i32 = arith.constant 0 : i32
    %c0_i32_0 = arith.constant 0 : i32
    return %arg0, %arg1, %c0_i32 : i32, i32, i32
  }
}

</mosaic_0001>

<llo_original>
// kernel: tpu_custom_call.1
$region0: #{tpu_custom_call.1}
  #allocation0 [shape = 'u32[]', space=smem, size = 0x4, offset = 0x4, fixed_abs, tag = 'smem constant byte address 0x4 - core index']
  #allocation1 [shape = 'u32[144,128]{1,0:T(1,128)}', space=vmem, size = 0x12000, scoped, tag = 'internal scratch']
  #allocation2 [shape = 'bf16[8,8,4]{2,1,0:T(8,128)(2,1)}', space=vmem, size = 0x4000, scoped, tag = 'scratch operand']
  #allocation3 [shape = 'bf16[8,8,4]{2,1,0:T(8,128)(2,1)}', space=vmem, size = 0x4000, scoped, tag = 'scratch operand']
  #allocation4 [shape = 'f32[8,32]{1,0:T(8,128)}', space=vmem, size = 0x1000, scoped, tag = 'scratch operand']
  %s0 = inlined_call_operand.vmem [shape: bf16[2,8,32], index: 0, kind: input, shape index: {}]
  %s1 = inlined_call_operand.vmem [shape: bf16[2,8,32], index: 1, kind: input, shape index: {}]
  %s2 = inlined_call_operand.vmem [shape: bf16[8,32,4], index: 2, kind: input, shape index: {}]
  %s3 = inlined_call_operand.vmem [shape: bf16[8,32,4], index: 3, kind: input, shape index: {}]
  %s4 = inlined_call_operand.vmem [shape: bf16[8,32,4], index: 4, kind: input, shape index: {}]
  %s5 = inlined_call_operand.vmem [shape: bf16[8,4,32], index: 5, kind: input, shape index: {}]
  %s6 = inlined_call_operand.vmem [shape: f32[1,32], index: 6, kind: input, shape index: {}]
  %s7 = inlined_call_operand.hbm [shape: f32[2,8,32], index: 7, kind: output, shape index: {}]
  %s8 = sld [smem:[#allocation0]]
  $region73: #{tpu_custom_call.1} parent=0
    _
  %s10 = ssub.s32 1, %s8
  %s11 = scalar_select 0, %s10, %s8
  $region1: #{tpu_custom_call.1} parent=0
    #allocation5 [shape = 'u8[8192]{0}', space=vmem, size = 0x2000, scoped, tag = 'output window, operand 0']
    #allocation6 [shape = 's32[2]{0}', space=sflag, size = 0x8, scoped, tag = 'scoped memory for tpu_custom_call.1']
    %12 = vsyncpa [#allocation6], 0
    %s13 = scalar_lea.sflag [#allocation6], 1
    %14 = vsyncpa %s13, 0
    loop: start=0, step=1, limit=18
    $region2: #{tpu_custom_call.1} parent=1 // loop_pre_header
      _
    $region3: #{tpu_custom_call.1} parent=1 // loop_header
      %s16 = sphi 0, %s20
      %p17 = scmp.ge.s32.totalorder %s16, 18
      %s23 = sphi 0, %s42
      %s24 = sphi 0, %s38
      %s25 = sphi 0, %s34
      %s26 = sphi 0, %s23
      %s27 = sphi 0, %s24
      %s28 = sphi 0, %s25
      %s29 = sphi 0, %s26
      %s30 = sphi 0, %s27
      %s31 = sphi 0, %s28
      %s47 = sphi 0, %s49
      %s50 = sphi 0, %s47
      %s51 = sphi 0, %s50
      %s67 = sphi 0, %s51
      %s73 = sphi 0, %s75
      %s76 = sphi 0, %s73
      %s77 = sphi 0, %s76
      %s93 = sphi 0, %s77
      %s99 = sphi 0, %s101
      %s102 = sphi 0, %s99
      %s103 = sphi 0, %s102
      %s119 = sphi 0, %s103
      %s125 = sphi 0, %s127
      %s128 = sphi 0, %s125
      %s129 = sphi 0, %s128
      %s145 = sphi 0, %s129
      %s151 = sphi 0, %s153
      %s154 = sphi 0, %s151
      %s155 = sphi 0, %s154
      %s171 = sphi 0, %s155
      %s177 = sphi 0, %s179
      %s180 = sphi 0, %s177
      %s181 = sphi 0, %s180
      %s197 = sphi 0, %s181
      %s201 = sphi 0, %s201
      %s203 = sphi 0, %s201
      %s204 = sphi 0, %s203
      %s218 = sphi 0, %s204
      %s226 = sphi 0, %s228
      %s229 = sphi 0, %s226
      %s230 = sphi 0, %s229
      %s246 = sphi 0, %s230
    $region4: #{tpu_custom_call.1} parent=1 // loop_header_branch
      %19 = sbr.rel (%p17) target = $region8
    $region5: #{tpu_custom_call.1} parent=1 // loop_body
      %s21 = ssub.s32 %s16, 1
      %s22 = ssub.s32 %s16, 2
      %s32 = sadd.s32 1, %s25
      %p33 = scmp.ge.s32.totalorder %s32, 8
      %s34 = scalar_select %p33, 0, %s32
      %s35 = sadd.s32 1, %s24
      %s36 = scalar_select %p33, %s35, %s24
      %p37 = scmp.ge.s32.totalorder %s36, 1
      %s38 = scalar_select %p37, 0, %s36
      %s39 = sadd.s32 1, %s23
      %s40 = scalar_select %p37, %s39, %s23
      %p41 = scmp.ge.s32.totalorder %s40, 2
      %s42 = scalar_select %p41, 0, %s40
      %s43 = ssub.s32 %s23, %s42
      %s44 = ssub.s32 %s24, %s38
      %s45 = sor.u32 %s43, %s44
      %p46 = scmp.eq.s32.totalorder %s45, 0
      %s48 = sadd.s32 %s47, 1
      %s49 = scalar_select %p46, %s47, %s48
      %p52 = pneg %p46
      %p53 = scmp.eq.s32.totalorder %s16, 15
      %p54 = por %p52, %p53
      %p55 = scmp.ne.s32.totalorder %s47, %s50
      %p56 = scmp.eq.s32.totalorder %s16, 0
      %p57 = por %p55, %p56
      %p58 = scmp.ne.s32.totalorder %s47, %s50
      %p59 = scmp.eq.s32.totalorder %s21, 15
      %p60 = por %p58, %p59
      %p61 = scmp.ne.s32.totalorder %s50, %s51
      %p62 = scmp.eq.s32.totalorder %s21, 0
      %p63 = por %p61, %p62
      %p64 = scmp.ne.s32.totalorder %s50, %s51
      %p65 = scmp.eq.s32.totalorder %s22, 15
      %p66 = por %p64, %p65
      %p68 = scmp.ne.s32.totalorder %s51, %s67
      %p69 = scmp.eq.s32.totalorder %s22, 0
      %p70 = por %p68, %p69
      %s71 = ssub.s32 %s23, %s42
      %p72 = scmp.eq.s32.totalorder %s71, 0
      %s74 = sadd.s32 %s73, 1
      %s75 = scalar_select %p72, %s73, %s74
      %p78 = pneg %p72
      %p79 = scmp.eq.s32.totalorder %s16, 15
      %p80 = por %p78, %p79
      %p81 = scmp.ne.s32.totalorder %s73, %s76
      %p82 = scmp.eq.s32.totalorder %s16, 0
      %p83 = por %p81, %p82
      %p84 = scmp.ne.s32.totalorder %s73, %s76
      %p85 = scmp.eq.s32.totalorder %s21, 15
      %p86 = por %p84, %p85
      %p87 = scmp.ne.s32.totalorder %s76, %s77
      %p88 = scmp.eq.s32.totalorder %s21, 0
      %p89 = por %p87, %p88
      %p90 = scmp.ne.s32.totalorder %s76, %s77
      %p91 = scmp.eq.s32.totalorder %s22, 15
      %p92 = por %p90, %p91
      %p94 = scmp.ne.s32.totalorder %s77, %s93
      %p95 = scmp.eq.s32.totalorder %s22, 0
      %p96 = por %p94, %p95
      %s97 = ssub.s32 %s25, %s34
      %p98 = scmp.eq.s32.totalorder %s97, 0
      %s100 = sadd.s32 %s99, 1
      %s101 = scalar_select %p98, %s99, %s100
      %p104 = pneg %p98
      %p105 = scmp.eq.s32.totalorder %s16, 15
      %p106 = por %p104, %p105
      %p107 = scmp.ne.s32.totalorder %s99, %s102
      %p108 = scmp.eq.s32.totalorder %s16, 0
      %p109 = por %p107, %p108
      %p110 = scmp.ne.s32.totalorder %s99, %s102
      %p111 = scmp.eq.s32.totalorder %s21, 15
      %p112 = por %p110, %p111
      %p113 = scmp.ne.s32.totalorder %s102, %s103
      %p114 = scmp.eq.s32.totalorder %s21, 0
      %p115 = por %p113, %p114
      %p116 = scmp.ne.s32.totalorder %s102, %s103
      %p117 = scmp.eq.s32.totalorder %s22, 15
      %p118 = por %p116, %p117
      %p120 = scmp.ne.s32.totalorder %s103, %s119
      %p121 = scmp.eq.s32.totalorder %s22, 0
      %p122 = por %p120, %p121
      %s123 = ssub.s32 %s25, %s34
      %p124 = scmp.eq.s32.totalorder %s123, 0
      %s126 = sadd.s32 %s125, 1
      %s127 = scalar_select %p124, %s125, %s126
      %p130 = pneg %p124
      %p131 = scmp.eq.s32.totalorder %s16, 15
      %p132 = por %p130, %p131
      %p133 = scmp.ne.s32.totalorder %s125, %s128
      %p134 = scmp.eq.s32.totalorder %s16, 0
      %p135 = por %p133, %p134
      %p136 = scmp.ne.s32.totalorder %s125, %s128
      %p137 = scmp.eq.s32.totalorder %s21, 15
      %p138 = por %p136, %p137
      %p139 = scmp.ne.s32.totalorder %s128, %s129
      %p140 = scmp.eq.s32.totalorder %s21, 0
      %p141 = por %p139, %p140
      %p142 = scmp.ne.s32.totalorder %s128, %s129
      %p143 = scmp.eq.s32.totalorder %s22, 15
      %p144 = por %p142, %p143
      %p146 = scmp.ne.s32.totalorder %s129, %s145
      %p147 = scmp.eq.s32.totalorder %s22, 0
      %p148 = por %p146, %p147
      %s149 = ssub.s32 %s25, %s34
      %p150 = scmp.eq.s32.totalorder %s149, 0
      %s152 = sadd.s32 %s151, 1
      %s153 = scalar_select %p150, %s151, %s152
      %p156 = pneg %p150
      %p157 = scmp.eq.s32.totalorder %s16, 15
      %p158 = por %p156, %p157
      %p159 = scmp.ne.s32.totalorder %s151, %s154
      %p160 = scmp.eq.s32.totalorder %s16, 0
      %p161 = por %p159, %p160
      %p162 = scmp.ne.s32.totalorder %s151, %s154
      %p163 = scmp.eq.s32.totalorder %s21, 15
      %p164 = por %p162, %p163
      %p165 = scmp.ne.s32.totalorder %s154, %s155
      %p166 = scmp.eq.s32.totalorder %s21, 0
      %p167 = por %p165, %p166
      %p168 = scmp.ne.s32.totalorder %s154, %s155
      %p169 = scmp.eq.s32.totalorder %s22, 15
      %p170 = por %p168, %p169
      %p172 = scmp.ne.s32.totalorder %s155, %s171
      %p173 = scmp.eq.s32.totalorder %s22, 0
      %p174 = por %p172, %p173
      %s175 = ssub.s32 %s25, %s34
      %p176 = scmp.eq.s32.totalorder %s175, 0
      %s178 = sadd.s32 %s177, 1
      %s179 = scalar_select %p176, %s177, %s178
      %p182 = pneg %p176
      %p183 = scmp.eq.s32.totalorder %s16, 15
      %p184 = por %p182, %p183
      %p185 = scmp.ne.s32.totalorder %s177, %s180
      %p186 = scmp.eq.s32.totalorder %s16, 0
      %p187 = por %p185, %p186
      %p188 = scmp.ne.s32.totalorder %s177, %s180
      %p189 = scmp.eq.s32.totalorder %s21, 15
      %p190 = por %p188, %p189
      %p191 = scmp.ne.s32.totalorder %s180, %s181
      %p192 = scmp.eq.s32.totalorder %s21, 0
      %p193 = por %p191, %p192
      %p194 = scmp.ne.s32.totalorder %s180, %s181
      %p195 = scmp.eq.s32.totalorder %s22, 15
      %p196 = por %p194, %p195
      %p198 = scmp.ne.s32.totalorder %s181, %s197
      %p199 = scmp.eq.s32.totalorder %s22, 0
      %p200 = por %p198, %p199
      %s202 = sadd.s32 %s201, 1
      %p205 = scmp.eq.s32.totalorder %s16, 15
      %p206 = scmp.ne.s32.totalorder %s201, %s203
      %p207 = scmp.eq.s32.totalorder %s16, 0
      %p208 = por %p206, %p207
      %p209 = scmp.ne.s32.totalorder %s201, %s203
      %p210 = scmp.eq.s32.totalorder %s21, 15
      %p211 = por %p209, %p210
      %p212 = scmp.ne.s32.totalorder %s203, %s204
      %p213 = scmp.eq.s32.totalorder %s21, 0
      %p214 = por %p212, %p213
      %p215 = scmp.ne.s32.totalorder %s203, %s204
      %p216 = scmp.eq.s32.totalorder %s22, 15
      %p217 = por %p215, %p216
      %p219 = scmp.ne.s32.totalorder %s204, %s218
      %p220 = scmp.eq.s32.totalorder %s22, 0
      %p221 = por %p219, %p220
      %s222 = ssub.s32 %s23, %s42
      %s223 = ssub.s32 %s24, %s38
      %s224 = sor.u32 %s222, %s223
      %p225 = scmp.eq.s32.totalorder %s224, 0
      %s227 = sadd.s32 %s226, 1
      %s228 = scalar_select %p225, %s226, %s227
      %p231 = pneg %p225
      %p232 = scmp.eq.s32.totalorder %s16, 15
      %p233 = por %p231, %p232
      %p234 = scmp.ne.s32.totalorder %s226, %s229
      %p235 = scmp.eq.s32.totalorder %s16, 0
      %p236 = por %p234, %p235
      %p237 = scmp.ne.s32.totalorder %s226, %s229
      %p238 = scmp.eq.s32.totalorder %s21, 15
      %p239 = por %p237, %p238
      %p240 = scmp.ne.s32.totalorder %s229, %s230
      %p241 = scmp.eq.s32.totalorder %s21, 0
      %p242 = por %p240, %p241
      %p243 = scmp.ne.s32.totalorder %s229, %s230
      %p244 = scmp.eq.s32.totalorder %s22, 15
      %p245 = por %p243, %p244
      %p247 = scmp.ne.s32.totalorder %s230, %s246
      %p248 = scmp.eq.s32.totalorder %s22, 0
      %p249 = por %p247, %p248
      %p250 = scmp.le.s32.totalorder 1, %s16
      %p251 = scmp.lt.s32.totalorder %s16, 17
      %p252 = pnand %p250, %p251
      %p253 = pneg %p252
      // Predicated region
      $region9: #{tpu_custom_call.1} parent=5 // pred_check
        _
      $region10: #{tpu_custom_call.1} parent=5 // pred_check_branch
        %255 = sbr.rel (%p252) target = $region12
      $region11: #{tpu_custom_call.1} parent=5 // pred_region
        %s256 = ssub.s32 %s16, 1
        // Predicated region
        $region13: #{tpu_custom_call.1} parent=11 // pred_check
          %p257 = pneg %p214
        $region14: #{tpu_custom_call.1} parent=11 // pred_check_branch
          %259 = sbr.rel (%p257) target = $region16
        $region15: #{tpu_custom_call.1} parent=11 // pred_region
          _
        $region16: #{tpu_custom_call.1} parent=11 // pred_fallthru
          _
      $region12: #{tpu_custom_call.1} parent=5 // pred_fallthru
        _
      %p260 = scmp.lt.s32.totalorder %s16, 16
      // Predicated region
      $region17: #{tpu_custom_call.1} parent=5 // pred_check
        %p261 = pneg %p260
      $region18: #{tpu_custom_call.1} parent=5 // pred_check_branch
        %263 = sbr.rel (%p261) target = $region20
      $region19: #{tpu_custom_call.1} parent=5 // pred_region
        // Predicated region
        $region21: #{tpu_custom_call.1} parent=19 // pred_check
          %p264 = pneg %p57
        $region22: #{tpu_custom_call.1} parent=19 // pred_check_branch
          %266 = sbr.rel (%p264) target = $region24
        $region23: #{tpu_custom_call.1} parent=19 // pred_region
          %p267 = scmp.lt.s32.totalorder %s23, 1
          %s268 = scalar_select %p267, %s23, 1
          %p269 = scmp.lt.s32.totalorder %s24, 0
          %s270 = scalar_select %p269, %s24, 0
          %s271 = sadd.s32 %s270, %s268
          %s272 = smul.addr %s271, 4
          %s273 = scalar_lea.vmem %s0, %s272
        $region24: #{tpu_custom_call.1} parent=19 // pred_fallthru
          _
        // Predicated region
        $region25: #{tpu_custom_call.1} parent=19 // pred_check
          %p274 = pneg %p83
        $region26: #{tpu_custom_call.1} parent=19 // pred_check_branch
          %276 = sbr.rel (%p274) target = $region28
        $region27: #{tpu_custom_call.1} parent=19 // pred_region
          %p277 = scmp.lt.s32.totalorder %s23, 1
          %s278 = scalar_select %p277, %s23, 1
          %s279 = smul.addr %s278, 4
          %s280 = scalar_lea.vmem %s1, %s279
        $region28: #{tpu_custom_call.1} parent=19 // pred_fallthru
          _
        // Predicated region
        $region29: #{tpu_custom_call.1} parent=19 // pred_check
          %p281 = pneg %p109
        $region30: #{tpu_custom_call.1} parent=19 // pred_check_branch
          %283 = sbr.rel (%p281) target = $region32
        $region31: #{tpu_custom_call.1} parent=19 // pred_region
          %p284 = scmp.lt.s32.totalorder %s25, 7
          %s285 = scalar_select %p284, %s25, 7
          %s286 = smul.addr %s285, 4
          %s287 = smul.addr %s286, 4
          %s288 = scalar_lea.vmem %s2, %s287
        $region32: #{tpu_custom_call.1} parent=19 // pred_fallthru
          _
        // Predicated region
        $region33: #{tpu_custom_call.1} parent=19 // pred_check
          %p289 = pneg %p135
        $region34: #{tpu_custom_call.1} parent=19 // pred_check_branch
          %291 = sbr.rel (%p289) target = $region36
        $region35: #{tpu_custom_call.1} parent=19 // pred_region
          %p292 = scmp.lt.s32.totalorder %s25, 7
          %s293 = scalar_select %p292, %s25, 7
          %s294 = smul.addr %s293, 4
          %s295 = smul.addr %s294, 4
          %s296 = scalar_lea.vmem %s3, %s295
        $region36: #{tpu_custom_call.1} parent=19 // pred_fallthru
          _
        // Predicated region
        $region37: #{tpu_custom_call.1} parent=19 // pred_check
          %p297 = pneg %p161
        $region38: #{tpu_custom_call.1} parent=19 // pred_check_branch
          %299 = sbr.rel (%p297) target = $region40
        $region39: #{tpu_custom_call.1} parent=19 // pred_region
          %p300 = scmp.lt.s32.totalorder %s25, 7
          %s301 = scalar_select %p300, %s25, 7
          %s302 = smul.addr %s301, 4
          %s303 = smul.addr %s302, 4
          %s304 = scalar_lea.vmem %s4, %s303
        $region40: #{tpu_custom_call.1} parent=19 // pred_fallthru
          _
        // Predicated region
        $region41: #{tpu_custom_call.1} parent=19 // pred_check
          %p305 = pneg %p187
        $region42: #{tpu_custom_call.1} parent=19 // pred_check_branch
          %307 = sbr.rel (%p305) target = $region44
        $region43: #{tpu_custom_call.1} parent=19 // pred_region
          %p308 = scmp.lt.s32.totalorder %s25, 7
          %s309 = scalar_select %p308, %s25, 7
          %s310 = smul.addr %s309, 2
          %s311 = scalar_lea.vmem %s5, %s310
        $region44: #{tpu_custom_call.1} parent=19 // pred_fallthru
          _
      $region20: #{tpu_custom_call.1} parent=5 // pred_fallthru
        _
      %p312 = scmp.le.s32.totalorder 1, %s16
      %p313 = scmp.lt.s32.totalorder %s16, 17
      %p314 = pnand %p312, %p313
      %p315 = pneg %p314
      // Predicated region
      $region45: #{tpu_custom_call.1} parent=5 // pred_check
        _
      $region46: #{tpu_custom_call.1} parent=5 // pred_check_branch
        %317 = sbr.rel (%p314) target = $region48
      $region47: #{tpu_custom_call.1} parent=5 // pred_region
        %s318 = ssub.s32 %s16, 1
        %p319 = scmp.lt.s32.totalorder %s26, 1
        %s320 = scalar_select %p319, %s26, 1
        %p321 = scmp.lt.s32.totalorder %s27, 0
        %s322 = scalar_select %p321, %s27, 0
        %s323 = sadd.s32 %s322, %s320
        %s324 = smul.addr %s323, 4
        %s325 = scalar_lea.vmem %s0, %s324
        %p326 = pneg %p63
        %p327 = pneg %p60
        %p328 = scmp.lt.s32.totalorder %s26, 1
        %s329 = scalar_select %p328, %s26, 1
        %s330 = smul.addr %s329, 4
        %s331 = scalar_lea.vmem %s1, %s330
        %p332 = pneg %p89
        %p333 = pneg %p86
        %p334 = scmp.lt.s32.totalorder %s28, 7
        %s335 = scalar_select %p334, %s28, 7
        %s336 = smul.addr %s335, 4
        %s337 = smul.addr %s336, 4
        %s338 = scalar_lea.vmem %s2, %s337
        %p339 = pneg %p115
        %p340 = pneg %p112
        %p341 = scmp.lt.s32.totalorder %s28, 7
        %s342 = scalar_select %p341, %s28, 7
        %s343 = smul.addr %s342, 4
        %s344 = smul.addr %s343, 4
        %s345 = scalar_lea.vmem %s3, %s344
        %p346 = pneg %p141
        %p347 = pneg %p138
        %p348 = scmp.lt.s32.totalorder %s28, 7
        %s349 = scalar_select %p348, %s28, 7
        %s350 = smul.addr %s349, 4
        %s351 = smul.addr %s350, 4
        %s352 = scalar_lea.vmem %s4, %s351
        %p353 = pneg %p167
        %p354 = pneg %p164
        %p355 = scmp.lt.s32.totalorder %s28, 7
        %s356 = scalar_select %p355, %s28, 7
        %s357 = smul.addr %s356, 2
        %s358 = scalar_lea.vmem %s5, %s357
        %p359 = pneg %p193
        %p360 = pneg %p190
        %p361 = pneg %p214
        %p362 = pneg %p211
        %p363 = pneg %p242
        %p364 = pneg %p239
        %s365 = sand.u32 %s229, 1
        %s366 = scalar_lea.sflag [#allocation6], %s365
        %s367 = sand.u32 %s229, 1
        %s368 = smul.addr %s367, 8
        %s369 = scalar_lea.vmem [#allocation5], %s368
        %p370 = scmp.lt.s32.totalorder %s26, 1
        %s371 = scalar_select %p370, %s26, 1
        %p372 = scmp.lt.s32.totalorder %s27, 0
        %s373 = scalar_select %p372, %s27, 0
        %s374 = sadd.s32 %s373, %s371
        %s375 = smul.addr %s374, 4
        %s376 = scalar_lea.vmem %s0, %s375
        %p377 = scmp.lt.s32.totalorder %s26, 1
        %s378 = scalar_select %p377, %s26, 1
        %s379 = smul.addr %s378, 4
        %s380 = scalar_lea.vmem %s1, %s379
        %p381 = scmp.lt.s32.totalorder %s28, 7
        %s382 = scalar_select %p381, %s28, 7
        %s383 = smul.addr %s382, 4
        %s384 = smul.addr %s383, 4
        %s385 = scalar_lea.vmem %s2, %s384
        %p386 = scmp.lt.s32.totalorder %s28, 7
        %s387 = scalar_select %p386, %s28, 7
        %s388 = smul.addr %s387, 4
        %s389 = smul.addr %s388, 4
        %s390 = scalar_lea.vmem %s3, %s389
        %p391 = scmp.lt.s32.totalorder %s28, 7
        %s392 = scalar_select %p391, %s28, 7
        %s393 = smul.addr %s392, 4
        %s394 = smul.addr %s393, 4
        %s395 = scalar_lea.vmem %s4, %s394
        %p396 = scmp.lt.s32.totalorder %s28, 7
        %s397 = scalar_select %p396, %s28, 7
        %s398 = smul.addr %s397, 2
        %s399 = scalar_lea.vmem %s5, %s398
        %p401 = scmp.eq.s32.totalorder %s27, 0
        // Predicated region
        $region49: #{tpu_custom_call.1} parent=47 // pred_check
          %p402 = pneg %p401
        $region50: #{tpu_custom_call.1} parent=47 // pred_check_branch
          %404 = sbr.rel (%p402) target = $region52
        $region51: #{tpu_custom_call.1} parent=47 // pred_region
          %v405 = vld [vmem:[%s380] sm:$0xf]
          %v406 = vld [vmem:[%s390] sm:$0xf]
          %v407 = vld [vmem:[%s390 + $0x4] sm:$0xf]
          %v408 = vld [vmem:[%s390 + $0x8] sm:$0xf]
          %v409 = vld [vmem:[%s390 + $0xc] sm:$0xf]
          %v414 = vunpack.c.l.b16 %v406
          %v415 = vunpack.c.l.b16 %v407
          %v416 = vunpack.c.l.b16 %v408
          %v417 = vunpack.c.l.b16 %v409
          %v418 = vpack.c.b16 %v415, %v414
          %v419 = vpack.c.b16 %v417, %v416
          %vm422 = vcmask 261120
          %v424 = vsel %vm422, %v405, 0
          %426 = vmatprep.subr.bf16.mxu0 0
          %427 = vmatpush1.bf16.msra.mxu0 %v418
          %428 = vmatprep.subr.bf16.mxu0 0
          %429 = vmatpush1.bf16.msra.mxu0 %v419
          %430 = vmatprep.subr.bf16.mxu0 0
          %431 = vmatpush1.bf16.msra.mxu0 0
          %432 = vmatprep.subr.bf16.mxu0 0
          %433 = vmatpush1.bf16.msra.mxu0 0
          %434 = vmatprep.subr.bf16.mxu0 0
          %435 = vmatpush1.bf16.msra.mxu0 0
          %436 = vmatprep.subr.bf16.mxu0 0
          %437 = vmatpush1.bf16.msra.mxu0 0
          %438 = vmatprep.subr.bf16.mxu0 0
          %439 = vmatpush1.bf16.msra.mxu0 0
          %440 = vmatprep.subr.bf16.mxu0 0
          %441 = vmatpush1.bf16.msra.mxu0 0
          %442 = vmatprep.subr.bf16.mxu0 0
          %443 = vmatpush1.bf16.msra.mxu0 0
          %444 = vmatprep.subr.bf16.mxu0 0
          %445 = vmatpush1.bf16.msra.mxu0 0
          %446 = vmatprep.subr.bf16.mxu0 0
          %447 = vmatpush1.bf16.msra.mxu0 0
          %448 = vmatprep.subr.bf16.mxu0 0
          %449 = vmatpush1.bf16.msra.mxu0 0
          %450 = vmatprep.subr.bf16.mxu0 0
          %451 = vmatpush1.bf16.msra.mxu0 0
          %452 = vmatprep.subr.bf16.mxu0 0
          %453 = vmatpush1.bf16.msra.mxu0 0
          %454 = vmatprep.subr.bf16.mxu0 0
          %455 = vmatpush1.bf16.msra.mxu0 0
          %456 = vmatprep.subr.bf16.mxu0 0
          %457 = vmatpush1.bf16.msra.mxu0 0
          %458 = vmatprep.mubr.bf16.mxu0 0
          %459 = vmatmul.mubr.bf16.gmra.mrb[0].mxu0 %v424
          %v460 = vpop.f32.mrb[0].mxu0
          %v461 = vadd.f32 0.0, %v460
          %v462 = vpop.f32.mrb[0].mxu0
          %v463 = vpop.f32.mrb[0].mxu0
          %v464 = vpop.f32.mrb[0].mxu0
          %465 = vdwg.mxu0
          %v466 = vld [vmem:[%s395] sm:$0xf]
          %v467 = vld [vmem:[%s395 + $0x4] sm:$0xf]
          %v468 = vld [vmem:[%s395 + $0x8] sm:$0xf]
          %v469 = vld [vmem:[%s395 + $0xc] sm:$0xf]
          %v474 = vunpack.c.l.b16 %v466
          %v475 = vunpack.c.l.b16 %v467
          %v476 = vunpack.c.l.b16 %v468
          %v477 = vunpack.c.l.b16 %v469
          %v478 = vpack.c.b16 %v475, %v474
          %v479 = vpack.c.b16 %v477, %v476
          %482 = vmatprep.subr.bf16.mxu0 0
          %483 = vmatpush1.bf16.msra.mxu0 %v478
          %484 = vmatprep.subr.bf16.mxu0 0
          %485 = vmatpush1.bf16.msra.mxu0 %v479
          %486 = vmatprep.subr.bf16.mxu0 0
          %487 = vmatpush1.bf16.msra.mxu0 0
          %488 = vmatprep.subr.bf16.mxu0 0
          %489 = vmatpush1.bf16.msra.mxu0 0
          %490 = vmatprep.subr.bf16.mxu0 0
          %491 = vmatpush1.bf16.msra.mxu0 0
          %492 = vmatprep.subr.bf16.mxu0 0
          %493 = vmatpush1.bf16.msra.mxu0 0
          %494 = vmatprep.subr.bf16.mxu0 0
          %495 = vmatpush1.bf16.msra.mxu0 0
          %496 = vmatprep.subr.bf16.mxu0 0
          %497 = vmatpush1.bf16.msra.mxu0 0
          %498 = vmatprep.subr.bf16.mxu0 0
          %499 = vmatpush1.bf16.msra.mxu0 0
          %500 = vmatprep.subr.bf16.mxu0 0
          %501 = vmatpush1.bf16.msra.mxu0 0
          %502 = vmatprep.subr.bf16.mxu0 0
          %503 = vmatpush1.bf16.msra.mxu0 0
          %504 = vmatprep.subr.bf16.mxu0 0
          %505 = vmatpush1.bf16.msra.mxu0 0
          %506 = vmatprep.subr.bf16.mxu0 0
          %507 = vmatpush1.bf16.msra.mxu0 0
          %508 = vmatprep.subr.bf16.mxu0 0
          %509 = vmatpush1.bf16.msra.mxu0 0
          %510 = vmatprep.subr.bf16.mxu0 0
          %511 = vmatpush1.bf16.msra.mxu0 0
          %512 = vmatprep.subr.bf16.mxu0 0
          %513 = vmatpush1.bf16.msra.mxu0 0
          %514 = vmatprep.mubr.bf16.mxu0 0
          %515 = vmatmul.mubr.bf16.gmra.mrb[0].mxu0 %v424
          %v516 = vpop.f32.mrb[0].mxu0
          %v517 = vadd.f32 0.0, %v516
          %v518 = vpop.f32.mrb[0].mxu0
          %v519 = vpop.f32.mrb[0].mxu0
          %v520 = vpop.f32.mrb[0].mxu0
          %521 = vdwg.mxu0
          %v522 = vpack.c.bf16 %v461, %v461
          %s523 = smul.addr %s28, 4
          %s524 = scalar_lea.vmem [#allocation2], %s523
          %vm525 = vcmask 27648
          %526 = vst.msk [vmem:[%s524] sm:$0xf] %vm525, %v522
          %v527 = vpack.c.bf16 %v517, %v517
          %s528 = smul.addr %s28, 4
          %s529 = scalar_lea.vmem [#allocation3], %s528
          %530 = vst.msk [vmem:[%s529] sm:$0xf] %vm525, %v527
        $region52: #{tpu_custom_call.1} parent=47 // pred_fallthru
          _
        %p531 = scmp.eq.s32.totalorder %s28, 0
        // Predicated region
        $region53: #{tpu_custom_call.1} parent=47 // pred_check
          %p532 = pneg %p531
        $region54: #{tpu_custom_call.1} parent=47 // pred_check_branch
          %534 = sbr.rel (%p532) target = $region56
        $region55: #{tpu_custom_call.1} parent=47 // pred_region
          %vm535 = vcmask 261120
          %536 = vst.msk [vmem:[#allocation4] sm:$0xff] %vm535, 0.0
        $region56: #{tpu_custom_call.1} parent=47 // pred_fallthru
          _
        %v537 = vld [vmem:[%s376] sm:$0xf]
        %v538 = vld [vmem:[%s385] sm:$0xf]
        %v539 = vld [vmem:[%s385 + $0x4] sm:$0xf]
        %v540 = vld [vmem:[%s385 + $0x8] sm:$0xf]
        %v541 = vld [vmem:[%s385 + $0xc] sm:$0xf]
        %v546 = vunpack.c.l.b16 %v538
        %v547 = vunpack.c.l.b16 %v539
        %v548 = vunpack.c.l.b16 %v540
        %v549 = vunpack.c.l.b16 %v541
        %v550 = vpack.c.b16 %v547, %v546
        %v551 = vpack.c.b16 %v549, %v548
        %vm554 = vcmask 261120
        %v556 = vsel %vm554, %v537, 0
        %558 = vmatprep.subr.bf16.mxu0 0
        %559 = vmatpush1.bf16.msra.mxu0 %v550
        %560 = vmatprep.subr.bf16.mxu0 0
        %561 = vmatpush1.bf16.msra.mxu0 %v551
        %562 = vmatprep.subr.bf16.mxu0 0
        %563 = vmatpush1.bf16.msra.mxu0 0
        %564 = vmatprep.subr.bf16.mxu0 0
        %565 = vmatpush1.bf16.msra.mxu0 0
        %566 = vmatprep.subr.bf16.mxu0 0
        %567 = vmatpush1.bf16.msra.mxu0 0
        %568 = vmatprep.subr.bf16.mxu0 0
        %569 = vmatpush1.bf16.msra.mxu0 0
        %570 = vmatprep.subr.bf16.mxu0 0
        %571 = vmatpush1.bf16.msra.mxu0 0
        %572 = vmatprep.subr.bf16.mxu0 0
        %573 = vmatpush1.bf16.msra.mxu0 0
        %574 = vmatprep.subr.bf16.mxu0 0
        %575 = vmatpush1.bf16.msra.mxu0 0
        %576 = vmatprep.subr.bf16.mxu0 0
        %577 = vmatpush1.bf16.msra.mxu0 0
        %578 = vmatprep.subr.bf16.mxu0 0
        %579 = vmatpush1.bf16.msra.mxu0 0
        %580 = vmatprep.subr.bf16.mxu0 0
        %581 = vmatpush1.bf16.msra.mxu0 0
        %582 = vmatprep.subr.bf16.mxu0 0
        %583 = vmatpush1.bf16.msra.mxu0 0
        %584 = vmatprep.subr.bf16.mxu0 0
        %585 = vmatpush1.bf16.msra.mxu0 0
        %586 = vmatprep.subr.bf16.mxu0 0
        %587 = vmatpush1.bf16.msra.mxu0 0
        %588 = vmatprep.subr.bf16.mxu0 0
        %589 = vmatpush1.bf16.msra.mxu0 0
        %590 = vmatprep.mubr.bf16.mxu0 0
        %591 = vmatmul.mubr.bf16.gmra.mrb[0].mxu0 %v556
        %v592 = vpop.f32.mrb[0].mxu0
        %v593 = vadd.f32 0.0, %v592
        %v594 = vpop.f32.mrb[0].mxu0
        %v595 = vpop.f32.mrb[0].mxu0
        %v596 = vpop.f32.mrb[0].mxu0
        %597 = vdwg.mxu0
        %v598 = vpack.c.bf16 %v593, %v593
        %s599 = smul.addr %s28, 4
        %s600 = scalar_lea.vmem [#allocation2], %s599
        %v601 = vld [vmem:[%s600] sm:$0xf]
        %vm602 = vcmask 31744
        %v604 = vsel %vm602, %v598, 0
        %v607 = vsel %vm602, %v601, 0
        %609 = vmatprep.subr.bf16.mxu0 0
        %610 = vmatpush1.bf16.xpose.msra.mxu0 %v607
        %611 = vmatprep.subr.bf16.mxu0 0
        %612 = vmatpush1.bf16.xpose.msra.mxu0 0
        %613 = vmatprep.subr.bf16.mxu0 0
        %614 = vmatpush1.bf16.xpose.msra.mxu0 0
        %615 = vmatprep.subr.bf16.mxu0 0
        %616 = vmatpush1.bf16.xpose.msra.mxu0 0
        %617 = vmatprep.subr.bf16.mxu0 0
        %618 = vmatpush1.bf16.xpose.msra.mxu0 0
        %619 = vmatprep.subr.bf16.mxu0 0
        %620 = vmatpush1.bf16.xpose.msra.mxu0 0
        %621 = vmatprep.subr.bf16.mxu0 0
        %622 = vmatpush1.bf16.xpose.msra.mxu0 0
        %623 = vmatprep.subr.bf16.mxu0 0
        %624 = vmatpush1.bf16.xpose.msra.mxu0 0
        %625 = vmatprep.subr.bf16.mxu0 0
        %626 = vmatpush1.bf16.xpose.msra.mxu0 0
        %627 = vmatprep.subr.bf16.mxu0 0
        %628 = vmatpush1.bf16.xpose.msra.mxu0 0
        %629 = vmatprep.subr.bf16.mxu0 0
        %630 = vmatpush1.bf16.xpose.msra.mxu0 0
        %631 = vmatprep.subr.bf16.mxu0 0
        %632 = vmatpush1.bf16.xpose.msra.mxu0 0
        %633 = vmatprep.subr.bf16.mxu0 0
        %634 = vmatpush1.bf16.xpose.msra.mxu0 0
        %635 = vmatprep.subr.bf16.mxu0 0
        %636 = vmatpush1.bf16.xpose.msra.mxu0 0
        %637 = vmatprep.subr.bf16.mxu0 0
        %638 = vmatpush1.bf16.xpose.msra.mxu0 0
        %639 = vmatprep.subr.bf16.mxu0 0
        %640 = vmatpush1.bf16.xpose.msra.mxu0 0
        %641 = vmatprep.mubr.bf16.mxu0 0
        %642 = vmatmul.mubr.bf16.gmra.mrb[0].mxu0 %v604
        %v643 = vpop.f32.mrb[0].mxu0
        %v644 = vadd.f32 0.0, %v643
        %v645 = vpop.f32.mrb[0].mxu0
        %v646 = vpop.f32.mrb[0].mxu0
        %v647 = vpop.f32.mrb[0].mxu0
        %648 = vdwg.mxu0
        %vm649 = vcmask 64512
        %v650 = vsel %vm649, %v644, -inf
        %651 = vmax.xlane.f32.xlu0 %v650
        %v652 = vpop.xlane.xlu0 %651
        %v653 = vsub.f32 %v644, %v652
        %v654 = vmul.f32 %v653, 1.442695
        %v655 = vpow.pop %v654
        %v656 = vsel %vm649, %v655, 0.0
        %657 = vadd.xlane.f32.xlu0 %v656
        %v658 = vpop.xlane.xlu0 %657
        %v659 = vpack.c.bf16 %v655, %v655
        %s660 = smul.addr %s28, 4
        %s661 = scalar_lea.vmem [#allocation3], %s660
        %v662 = vld [vmem:[%s661] sm:$0xf]
        %v664 = vsel %vm649, %v659, 0
        %vm666 = vcmask 1043456
        %v668 = vsel %vm666, %v662, 0
        %670 = vmatprep.subr.bf16.mxu0 0
        %671 = vmatpush1.bf16.msra.mxu0 %v668
        %672 = vmatprep.subr.bf16.mxu0 0
        %673 = vmatpush1.bf16.msra.mxu0 0
        %674 = vmatprep.subr.bf16.mxu0 0
        %675 = vmatpush1.bf16.msra.mxu0 0
        %676 = vmatprep.subr.bf16.mxu0 0
        %677 = vmatpush1.bf16.msra.mxu0 0
        %678 = vmatprep.subr.bf16.mxu0 0
        %679 = vmatpush1.bf16.msra.mxu0 0
        %680 = vmatprep.subr.bf16.mxu0 0
        %681 = vmatpush1.bf16.msra.mxu0 0
        %682 = vmatprep.subr.bf16.mxu0 0
        %683 = vmatpush1.bf16.msra.mxu0 0
        %684 = vmatprep.subr.bf16.mxu0 0
        %685 = vmatpush1.bf16.msra.mxu0 0
        %686 = vmatprep.subr.bf16.mxu0 0
        %687 = vmatpush1.bf16.msra.mxu0 0
        %688 = vmatprep.subr.bf16.mxu0 0
        %689 = vmatpush1.bf16.msra.mxu0 0
        %690 = vmatprep.subr.bf16.mxu0 0
        %691 = vmatpush1.bf16.msra.mxu0 0
        %692 = vmatprep.subr.bf16.mxu0 0
        %693 = vmatpush1.bf16.msra.mxu0 0
        %694 = vmatprep.subr.bf16.mxu0 0
        %695 = vmatpush1.bf16.msra.mxu0 0
        %696 = vmatprep.subr.bf16.mxu0 0
        %697 = vmatpush1.bf16.msra.mxu0 0
        %698 = vmatprep.subr.bf16.mxu0 0
        %699 = vmatpush1.bf16.msra.mxu0 0
        %700 = vmatprep.subr.bf16.mxu0 0
        %701 = vmatpush1.bf16.msra.mxu0 0
        %702 = vmatprep.mubr.bf16.mxu0 0
        %703 = vmatmul.mubr.bf16.gmra.mrb[0].mxu0 %v664
        %v704 = vpop.f32.mrb[0].mxu0
        %v705 = vadd.f32 0.0, %v704
        %v706 = vpop.f32.mrb[0].mxu0
        %v707 = vpop.f32.mrb[0].mxu0
        %v708 = vpop.f32.mrb[0].mxu0
        %709 = vdwg.mxu0
        %v710 = vrcp.pop %v658
        %v711 = vmul.f32 %v705, %v710
        %v712 = vld [vmem:[#allocation4] sm:$0xff]
        %v713 = vpack.c.bf16 %v711, %v711
        %v714 = vld [vmem:[%s399] sm:$0x3]
        %v716 = vsel %vm602, %v713, 0
        %vm718 = vcmask 1041408
        %v720 = vsel %vm718, %v714, 0
        %722 = vmatprep.subr.bf16.mxu0 0
        %723 = vmatpush1.bf16.msra.mxu0 %v720
        %724 = vmatprep.subr.bf16.mxu0 0
        %725 = vmatpush1.bf16.msra.mxu0 0
        %726 = vmatprep.subr.bf16.mxu0 0
        %727 = vmatpush1.bf16.msra.mxu0 0
        %728 = vmatprep.subr.bf16.mxu0 0
        %729 = vmatpush1.bf16.msra.mxu0 0
        %730 = vmatprep.subr.bf16.mxu0 0
        %731 = vmatpush1.bf16.msra.mxu0 0
        %732 = vmatprep.subr.bf16.mxu0 0
        %733 = vmatpush1.bf16.msra.mxu0 0
        %734 = vmatprep.subr.bf16.mxu0 0
        %735 = vmatpush1.bf16.msra.mxu0 0
        %736 = vmatprep.subr.bf16.mxu0 0
        %737 = vmatpush1.bf16.msra.mxu0 0
        %738 = vmatprep.subr.bf16.mxu0 0
        %739 = vmatpush1.bf16.msra.mxu0 0
        %740 = vmatprep.subr.bf16.mxu0 0
        %741 = vmatpush1.bf16.msra.mxu0 0
        %742 = vmatprep.subr.bf16.mxu0 0
        %743 = vmatpush1.bf16.msra.mxu0 0
        %744 = vmatprep.subr.bf16.mxu0 0
        %745 = vmatpush1.bf16.msra.mxu0 0
        %746 = vmatprep.subr.bf16.mxu0 0
        %747 = vmatpush1.bf16.msra.mxu0 0
        %748 = vmatprep.subr.bf16.mxu0 0
        %749 = vmatpush1.bf16.msra.mxu0 0
        %750 = vmatprep.subr.bf16.mxu0 0
        %751 = vmatpush1.bf16.msra.mxu0 0
        %752 = vmatprep.subr.bf16.mxu0 0
        %753 = vmatpush1.bf16.msra.mxu0 0
        %754 = vmatprep.mubr.bf16.mxu0 0
        %755 = vmatmul.mubr.bf16.gmra.mrb[0].mxu0 %v716
        %v756 = vpop.f32.mrb[0].mxu0
        %v757 = vadd.f32 0.0, %v756
        %v758 = vpop.f32.mrb[0].mxu0
        %v759 = vpop.f32.mrb[0].mxu0
        %v760 = vpop.f32.mrb[0].mxu0
        %761 = vdwg.mxu0
        %v762 = vadd.f32 %v712, %v757
        %763 = vst.msk [vmem:[#allocation4] sm:$0xff] %vm554, %v762
        %p764 = scmp.eq.s32.totalorder %s28, 7
        // Predicated region
        $region57: #{tpu_custom_call.1} parent=47 // pred_check
          %p765 = pneg %p764
        $region58: #{tpu_custom_call.1} parent=47 // pred_check_branch
          %767 = sbr.rel (%p765) target = $region60
        $region59: #{tpu_custom_call.1} parent=47 // pred_region
          %v768 = vld [vmem:[#allocation4] sm:$0xff]
          %v769 = vld [vmem:[%s6] sm:$0x1]
          %v771 = vlaneseq
          %v772 = vshrl.u32 %v771, 7
          %v773 = vsub.s32 0, %v772
          %v774 = vrot.slane %v769, %v773
          %v776 = vadd.f32 %v768, %v774
          %777 = vst.msk [vmem:[%s369] sm:$0xff] %vm554, %v776
        $region60: #{tpu_custom_call.1} parent=47 // pred_fallthru
          _
        %s778 = sand.u32 %s229, 1
        %s779 = scalar_lea.sflag [#allocation6], %s778
        %s780 = sand.u32 %s229, 1
        %s781 = smul.addr %s780, 8
        %s782 = scalar_lea.vmem [#allocation5], %s781
        // Predicated region
        $region61: #{tpu_custom_call.1} parent=47 // pred_check
          %p783 = pneg %p239
        $region62: #{tpu_custom_call.1} parent=47 // pred_check_branch
          %785 = sbr.rel (%p783) target = $region64
        $region63: #{tpu_custom_call.1} parent=47 // pred_region
          %s787 = ssub.s32 128, 128
          %788 = vsyncadd %s779, %s787
          %s789 = sadd.s32 %s27, %s26
          %s790 = smul.addr %s789, 128
          %s791 = scalar_lea.hbm %s7, %s790
          %s793 = sshll.u32 %s782, 4
          %s794 = int_to_ptr.vmem [resolvable:$true] %s793
          %796 = dma.vmem_to_hbm [thread:$0]  %s794, 128, %s791, %s779
        $region64: #{tpu_custom_call.1} parent=47 // pred_fallthru
          _
      $region48: #{tpu_custom_call.1} parent=5 // pred_fallthru
        _
      %p797 = scmp.le.s32.totalorder 2, %s16
      // Predicated region
      $region65: #{tpu_custom_call.1} parent=5 // pred_check
        %p798 = pneg %p797
      $region66: #{tpu_custom_call.1} parent=5 // pred_check_branch
        %800 = sbr.rel (%p798) target = $region68
      $region67: #{tpu_custom_call.1} parent=5 // pred_region
        %s801 = ssub.s32 %s16, 2
        // Predicated region
        $region69: #{tpu_custom_call.1} parent=67 // pred_check
          %p802 = pneg %p245
        $region70: #{tpu_custom_call.1} parent=67 // pred_check_branch
          %804 = sbr.rel (%p802) target = $region72
        $region71: #{tpu_custom_call.1} parent=67 // pred_region
          %s805 = sand.u32 %s230, 1
          %s806 = scalar_lea.sflag [#allocation6], %s805
          %s807 = sand.u32 %s230, 1
          %s808 = smul.addr %s807, 8
          %s809 = scalar_lea.vmem [#allocation5], %s808
          %810 = dma.done %s806, 128
        $region72: #{tpu_custom_call.1} parent=67 // pred_fallthru
          _
      $region68: #{tpu_custom_call.1} parent=5 // pred_fallthru
        _
    $region6: #{tpu_custom_call.1} parent=1 // loop_footer
      %s20 = sadd.s32 1, %s16
    $region7: #{tpu_custom_call.1} parent=1 // loop_footer_branch
      %15 = sbr.rel target = $region3
    $region8: #{tpu_custom_call.1} parent=1 // loop_exit
      _
    %811 = vsyncpa [#allocation6], 1
    %s812 = scalar_lea.sflag [#allocation6], 1
    %813 = vsyncpa %s812, 1

</llo_original>
